<compile_context>
chip_gen: v5e
topology: v5e:2x2
jax: 0.10.0
libtpu: 0.0.40
codegen_flags: <defaults>
</compile_context>

<pallas_src>
import jax
import jax.numpy as jnp
import numpy as np
from jax.experimental import pallas as pl
from jax.experimental.pallas import tpu as pltpu

_SUBLANE = 8
_LANE = 128


def _pe_add_kernel(x_ref, pe_ref, o_ref):
    # x_ref / o_ref: (BT, KT) block of the flattened (B, C*L) input / output.
    # pe_ref: (1, KT) positional-encoding block, broadcast-added over the batch rows.
    o_ref[...] = x_ref[...] + pe_ref[...]


def _build_pe(C: int, L: int, dtype) -> jax.Array:
    """Positional-encoding table, shape (C, L), PositionalEncodingPermute1D semantics."""
    channels_pad = -(-C // 2) * 2                                  # ceil(C/2) * 2
    inv_freq = 1.0 / (10000.0 ** (jnp.arange(0, channels_pad, 2, dtype=jnp.float32)
                                  / channels_pad))                 # (channels_pad//2,)
    pos = jnp.arange(L, dtype=jnp.float32)                         # (L,)
    ang = pos[:, None] * inv_freq[None, :]                         # (L, channels_pad//2)
    emb = jnp.stack((jnp.sin(ang), jnp.cos(ang)), axis=-1)         # interleave sin/cos
    emb = emb.reshape(L, channels_pad)[:, :C]                      # (L, C)
    return emb.T.astype(dtype)                                     # (C, L)


def _choose_tiles(B: int, K: int, itemsize: int, target_bytes: int):
    """Pick (BT, KT) block extents for the flattened (B, K) array.

    Blocks are sized by bytes (~target_bytes) so every dtype sits on the HBM
    roofline plateau.  BT is either full B or a multiple of 8, KT is either full K
    or a multiple of 128 (the (8, 128) block-divisibility rule).
    """
    budget = max(_LANE, target_bytes // itemsize)                  # elements per block

    if B * K <= budget:
        # Everything fits one block.  If it is big enough to be worth sharing,
        # split the lane axis once so v7x's second TensorCore gets a tile.
        if B * K * itemsize >= (1 << 20) and K >= 2 * _LANE:
            half = -(-((K + 1) // 2) // _LANE) * _LANE             # ceil(K/2) -> 128-mult
            return B, half
        return B, K

    rows = budget // K                                             # lane-dense rows per block
    if rows >= _SUBLANE:
        return (rows // _SUBLANE) * _SUBLANE, K                    # fold batch, full rows

    # Even a few rows exceed the budget: fix BT small and tile the lane axis.
    bt = B if B < _SUBLANE else _SUBLANE
    kt = max(_LANE, (budget // bt // _LANE) * _LANE)
    return bt, min(kt, K)


def positional_encoding(x: jax.Array, *, target_block_bytes: int = 4 << 20) -> jax.Array:
    """x: (B, C, L) float array. Returns x + positional encoding (same shape / dtype)."""
    B, C, L = x.shape
    K = C * L
    itemsize = jnp.dtype(x.dtype).itemsize

    pe = _build_pe(C, L, x.dtype).reshape(1, K)                    # (1, C*L), lane-dense
    xf = x.reshape(B, K)                                           # free (row-major) reshape

    BT, KT = _choose_tiles(B, K, itemsize, target_block_bytes)
    # Batch axis innermost so the b-invariant PE tile stays resident across batch steps.
    grid = (pl.cdiv(K, KT), pl.cdiv(B, BT))

    out = pl.pallas_call(
        _pe_add_kernel,
        out_shape=jax.ShapeDtypeStruct((B, K), x.dtype),
        grid_spec=pltpu.PrefetchScalarGridSpec(
            num_scalar_prefetch=0,
            grid=grid,
            in_specs=[
                pl.BlockSpec((BT, KT), lambda ki, bi: (bi, ki)),
                pl.BlockSpec((1, KT), lambda ki, bi: (0, ki)),     # b-invariant PE tile
            ],
            out_specs=pl.BlockSpec((BT, KT), lambda ki, bi: (bi, ki)),
        ),
        compiler_params=pltpu.CompilerParams(
            # Pure elementwise add with no carried state: both axes are safe to
            # shard across v7x's two TensorCores (no-op on v5e/v6e).
            dimension_semantics=("parallel", "parallel"),
            # Double-buffered ~4 MiB in + out (+ PE) exceeds v5e's 16 MiB default
            # scoped-VMEM limit; 40 MiB is safe on v5e/v6e (128 MiB) and v7x (64 MiB).
            vmem_limit_bytes=40 << 20,
        ),
    )(xf, pe)
    return out.reshape(B, C, L)


def _reference(x: np.ndarray) -> np.ndarray:
    # Pure-numpy port of PositionalEncodingPermute1D semantics for verification.
    B, C, L = x.shape
    channels_pad = int(np.ceil(C / 2) * 2)
    inv_freq = 1.0 / (10000.0 ** (np.arange(0, channels_pad, 2, dtype=np.float32) / channels_pad))
    pos = np.arange(L, dtype=np.float32)
    sin_inp = np.einsum("i,j->ij", pos, inv_freq)                  # (L, channels_pad//2)
    emb = np.stack((np.sin(sin_inp), np.cos(sin_inp)), axis=-1).reshape(L, channels_pad)
    pe = emb[:, :C]                                                # (L, C)
    return x + pe.T[None, :, :].astype(x.dtype)                    # (B, C, L)


if __name__ == "__main__":
    key = jax.random.PRNGKey(0)

    # Primary small test (odd C exercises the channels_pad truncation path).
    B, C, L = 2, 5, 16
    x = jax.random.normal(key, (B, C, L), dtype=jnp.float32)
    out = jax.block_until_ready(positional_encoding(x))
    np.testing.assert_allclose(np.asarray(out), _reference(np.asarray(x)), rtol=1e-5, atol=1e-5)

    # Secondary test with a tiny byte budget to exercise the multi-block / ragged path.
    B2, C2, L2 = 4, 6, 100
    x2 = jax.random.normal(jax.random.PRNGKey(1), (B2, C2, L2), dtype=jnp.float32)
    out2 = jax.block_until_ready(positional_encoding(x2, target_block_bytes=1024))
    np.testing.assert_allclose(np.asarray(out2), _reference(np.asarray(x2)), rtol=1e-5, atol=1e-5)

    print("KERNEL_OK")
</pallas_src>

<mosaic_0001>
module attributes {stable_mosaic.version = 11 : i64} {
  func.func @_pe_add_kernel(%arg0: i32, %arg1: i32, %arg2: memref<2x80xf32, #tpu.memory_space<vmem>>, %arg3: memref<1x80xf32, #tpu.memory_space<vmem>>, %arg4: memref<2x80xf32, #tpu.memory_space<vmem>>) attributes {dimension_semantics = [#tpu.dimension_semantics<parallel>, #tpu.dimension_semantics<parallel>], iteration_bounds = array<i64: 1, 1>, scalar_prefetch = 0 : i64, scratch_operands = 0 : i64, tpu.core_type = #tpu.core_type<tc>, window_params = [{transform_indices = @transform_0, window_bounds = array<i64: 2, 80>}, {transform_indices = @transform_1, window_bounds = array<i64: 1, 80>}, {transform_indices = @transform_2, window_bounds = array<i64: 2, 80>}]} {
    %c0 = arith.constant 0 : index
    %c0_0 = arith.constant 0 : index
    %0 = vector.load %arg2[%c0, %c0_0] : memref<2x80xf32, #tpu.memory_space<vmem>>, vector<2x80xf32>
    %c0_1 = arith.constant 0 : index
    %c0_2 = arith.constant 0 : index
    %1 = vector.load %arg3[%c0_1, %c0_2] : memref<1x80xf32, #tpu.memory_space<vmem>>, vector<1x80xf32>
    %2 = vector.broadcast %1 : vector<1x80xf32> to vector<2x80xf32>
    %3 = arith.addf %0, %2 : vector<2x80xf32>
    %c0_3 = arith.constant 0 : index
    %c0_4 = arith.constant 0 : index
    %4 = vector.load %arg4[%c0_3, %c0_4] : memref<2x80xf32, #tpu.memory_space<vmem>>, vector<2x80xf32>
    tpu.vector_store %arg4[%c0_3, %c0_4], %3 {strides = array<i32>} : memref<2x80xf32, #tpu.memory_space<vmem>>, vector<2x80xf32>,
    return
  }
  func.func @transform_0(%arg0: i32, %arg1: i32) -> (i32, i32) {
    %c0_i32 = arith.constant 0 : i32
    return %arg1, %arg0 : i32, i32
  }
  func.func @transform_1(%arg0: i32, %arg1: i32) -> (i32, i32) {
    %c0_i32 = arith.constant 0 : i32
    %c0_i32_0 = arith.constant 0 : i32
    return %c0_i32, %arg0 : i32, i32
  }
  func.func @transform_2(%arg0: i32, %arg1: i32) -> (i32, i32) {
    %c0_i32 = arith.constant 0 : i32
    return %arg1, %arg0 : i32, i32
  }
}

</mosaic_0001>

<llo_original>
// kernel: tpu_custom_call.1
$region0: #{tpu_custom_call.1}
  #allocation0 [shape = 'u32[]', space=smem, size = 0x4, offset = 0x4, fixed_abs, tag = 'smem constant byte address 0x4 - core index']
  #allocation1 [shape = 'u32[72,128]{1,0:T(1,128)}', space=vmem, size = 0x9000, scoped, tag = 'internal scratch']
  %s0 = inlined_call_operand.hbm [shape: f32[2,80], index: 0, kind: input, shape index: {}]
  %s1 = inlined_call_operand.hbm [shape: f32[1,80], index: 1, kind: input, shape index: {}]
  %s2 = inlined_call_operand.hbm [shape: f32[2,80], index: 2, kind: output, shape index: {}]
  %s3 = sld [smem:[#allocation0]]
  $region26: #{tpu_custom_call.1} parent=0
    _
  %s5 = ssub.s32 1, %s3
  %s6 = scalar_select 0, %s5, %s3
  $region1: #{tpu_custom_call.1} parent=0
    #allocation2 [shape = 'u8[1024]{0}', space=vmem, size = 0x400, scoped, tag = 'input window, operand 0, single buffered']
    #allocation3 [shape = 's32[1]{0}', space=sflag, size = 0x4, scoped, tag = 'scoped memory for tpu_custom_call.1']
    #allocation4 [shape = 's32[1]{0}', space=sflag, size = 0x4, scoped, tag = 'scoped memory for tpu_custom_call.1']
    #allocation5 [shape = 'u8[512]{0}', space=vmem, size = 0x400, scoped, tag = 'input window, operand 1, single buffered']
    #allocation6 [shape = 's32[1]{0}', space=sflag, size = 0x4, scoped, tag = 'scoped memory for tpu_custom_call.1']
    #allocation7 [shape = 'u8[1024]{0}', space=vmem, size = 0x400, scoped, tag = 'output window, operand 0, single buffered']
    %7 = vsyncpa [#allocation3], 0
    %8 = vsyncpa [#allocation6], 0
    %9 = vsyncpa [#allocation4], 0
    // Predicated region
    $region2: #{tpu_custom_call.1} parent=1 // pred_check
      _
    $region3: #{tpu_custom_call.1} parent=1 // pred_check_branch
      %11 = sbr.rel (0) target = $region5
    $region4: #{tpu_custom_call.1} parent=1 // pred_region
      %13 = vsyncadd [#allocation3], 0
      %s15 = sshll.u32 %s0, 4
      %s16 = int_to_ptr.hbm [resolvable:$true] %s15
      %s17 = sshll.u32 [#allocation2], 4
      %s18 = int_to_ptr.vmem [resolvable:$true] %s17
      %20 = dma.hbm_to_vmem [thread:$0]  %s16, 32, %s18, [#allocation3]
    $region5: #{tpu_custom_call.1} parent=1 // pred_fallthru
      _
    // Predicated region
    $region6: #{tpu_custom_call.1} parent=1 // pred_check
      _
    $region7: #{tpu_custom_call.1} parent=1 // pred_check_branch
      %22 = sbr.rel (0) target = $region9
    $region8: #{tpu_custom_call.1} parent=1 // pred_region
      %24 = vsyncadd [#allocation6], 0
      %s26 = sshll.u32 %s1, 4
      %s27 = int_to_ptr.hbm [resolvable:$true] %s26
      %s28 = sshll.u32 [#allocation5], 4
      %s29 = int_to_ptr.vmem [resolvable:$true] %s28
      %31 = dma.hbm_to_vmem [thread:$0]  %s27, 16, %s29, [#allocation6]
    $region9: #{tpu_custom_call.1} parent=1 // pred_fallthru
      _
    // Predicated region
    $region10: #{tpu_custom_call.1} parent=1 // pred_check
      _
    $region11: #{tpu_custom_call.1} parent=1 // pred_check_branch
      %33 = sbr.rel (0) target = $region13
    $region12: #{tpu_custom_call.1} parent=1 // pred_region
      %35 = dma.done [#allocation3], 32
    $region13: #{tpu_custom_call.1} parent=1 // pred_fallthru
      _
    // Predicated region
    $region14: #{tpu_custom_call.1} parent=1 // pred_check
      _
    $region15: #{tpu_custom_call.1} parent=1 // pred_check_branch
      %37 = sbr.rel (0) target = $region17
    $region16: #{tpu_custom_call.1} parent=1 // pred_region
      %39 = dma.done [#allocation6], 16
    $region17: #{tpu_custom_call.1} parent=1 // pred_fallthru
      _
    %v40 = vld [vmem:[#allocation2] sm:$0x3]
    %v41 = vld [vmem:[#allocation5] sm:$0x1]
    %v43 = vperm.slane %v41, 0
    %v45 = vadd.f32 %v40, %v43
    %vm46 = vcmask 648192
    %47 = vst.msk [vmem:[#allocation7] sm:$0x3] %vm46, %v45
    // Predicated region
    $region18: #{tpu_custom_call.1} parent=1 // pred_check
      _
    $region19: #{tpu_custom_call.1} parent=1 // pred_check_branch
      %49 = sbr.rel (0) target = $region21
    $region20: #{tpu_custom_call.1} parent=1 // pred_region
      %51 = vsyncadd [#allocation4], 0
      %s53 = sshll.u32 [#allocation7], 4
      %s54 = int_to_ptr.vmem [resolvable:$true] %s53
      %s55 = sshll.u32 %s2, 4
      %s56 = int_to_ptr.hbm [resolvable:$true] %s55
      %58 = dma.vmem_to_hbm [thread:$0]  %s54, 32, %s56, [#allocation4]
    $region21: #{tpu_custom_call.1} parent=1 // pred_fallthru
      _
    // Predicated region
    $region22: #{tpu_custom_call.1} parent=1 // pred_check
      _
    $region23: #{tpu_custom_call.1} parent=1 // pred_check_branch
      %60 = sbr.rel (0) target = $region25
    $region24: #{tpu_custom_call.1} parent=1 // pred_region
      %62 = dma.done [#allocation4], 32
    $region25: #{tpu_custom_call.1} parent=1 // pred_fallthru
      _
    %63 = vsyncpa [#allocation3], 1
    %64 = vsyncpa [#allocation6], 1
    %65 = vsyncpa [#allocation4], 1

</llo_original>
